<compile_context>
chip_gen: v5e
topology: v5e:2x2
jax: 0.10.0
libtpu: 0.0.40
codegen_flags: <defaults>
</compile_context>

<pallas_src>
import functools

import numpy as np
import jax
import jax.numpy as jnp
from jax import lax
from jax.experimental import pallas as pl
from jax.experimental.pallas import tpu as pltpu

LAMBDA_EXPLAINER = 1.0
LAMBDA_STRESS = 1.0
STRESS_PDIST_EPS = 1e-6    # nn.PairwiseDistance() default eps used inside StressCorrected
EXPL_PDIST_EPS = 1e-16     # nn.PairwiseDistance(p=2, eps=1e-16); vanishes in f32 forward
WEIGHT_EPS = 1e-7


def _round_up(x, m):
    return (x + m - 1) // m * m


def _custom_loss2_kernel(src_ref, dst_ref, delta_ref, imp_ref, out_ref,
                         err_acc, w_acc, *, p_true, m_true, tile_p):
    """src/dst: (D_pad, TILE_P) lane-dense stress-pair endpoints, delta: (1, TILE_P),
    imp: (M_pad, D_pad) important-node embeddings, out: (1, 1) scalar loss.
    err_acc / w_acc: (1, TILE_P) per-lane VMEM accumulators across the P grid axis."""
    k = pl.program_id(0)

    @pl.when(k == 0)
    def _init():
        err_acc[...] = jnp.zeros_like(err_acc)
        w_acc[...] = jnp.zeros_like(w_acc)

    # ---------- stress partial sums for this tile of pairs (lane-dense, VPU/EUP only) ----------
    col = lax.broadcasted_iota(jnp.int32, (1, tile_p), 1) + k * tile_p
    mask = (col < p_true).astype(jnp.float32)                       # (1, TILE_P) valid-pair mask

    diff = src_ref[...] - dst_ref[...] + STRESS_PDIST_EPS           # (D_pad, TILE_P)
    d2 = jnp.sum(diff * diff, axis=0, keepdims=True)                # (1, TILE_P) sublane reduce
    dist = jnp.sqrt(d2)                                             # (1, TILE_P) pairwise L2
    delta = delta_ref[...]                                          # (1, TILE_P)

    err_acc[...] += mask * (dist - delta) ** 2                      # masked squared error
    w_acc[...] += mask / (delta + WEIGHT_EPS)                       # masked stress weights

    # ---------- finalize: cross-lane reductions + explainer term, once ----------
    @pl.when(k == pl.num_programs(0) - 1)
    def _finalize():
        inv_p = 1.0 / float(p_true)
        sum_err = jnp.sum(err_acc[...], axis=1, keepdims=True)      # (1, 1)
        sum_w = jnp.sum(w_acc[...], axis=1, keepdims=True)          # (1, 1)
        stress = (sum_w * inv_p) * (sum_err * inv_p)                # mean(w) * MSE

        # explainer: sum_{i<j} ||imp_i - imp_j||_2 via Gram matrix on the MXU.
        imp = imp_ref[...]                                          # (M_pad, D_pad)
        mp = imp.shape[0]
        gram = lax.dot_general(imp, imp, (((1,), (1,)), ((), ())),
                               preferred_element_type=jnp.float32)  # (M_pad, M_pad) = A @ A^T
        row = lax.broadcasted_iota(jnp.int32, (mp, mp), 0)
        colp = lax.broadcasted_iota(jnp.int32, (mp, mp), 1)
        diag = jnp.where(row == colp, gram, 0.0)
        diag_col = jnp.sum(diag, axis=1, keepdims=True)             # (M_pad, 1)  ||a_i||^2
        diag_row = jnp.sum(diag, axis=0, keepdims=True)             # (1, M_pad)  ||a_j||^2
        d2p = diag_col + diag_row - 2.0 * gram                      # squared pairwise distances
        pdist = jnp.sqrt(jnp.maximum(d2p, 0.0))                     # clamp before sqrt
        tri = (colp > row) & (colp < m_true) & (row < m_true)       # strict upper triangle, real rows
        expl_rows = jnp.sum(jnp.where(tri, pdist, 0.0), axis=0, keepdims=True)   # (1, M_pad)
        explainer = jnp.sum(expl_rows, axis=1, keepdims=True)       # (1, 1)

        out_ref[...] = LAMBDA_STRESS * stress + LAMBDA_EXPLAINER * explainer


def custom_loss2(logits, shortest_paths, couples_indices, important_nodes):
    """logits: (N, D) float32 node embeddings; shortest_paths: (N, N) float32;
    couples_indices: (P, 2) int32; important_nodes: (M,) int32."""
    logits = logits.astype(jnp.float32)
    N, D = logits.shape
    P = int(couples_indices.shape[0])
    M = int(important_nodes.shape[0])

    # --- padding / tiling constants ---
    D_pad = _round_up(D, 8)                    # sublane multiple
    # Budget the lane tile from D so src+dst double-buffered tiles stay << scoped-VMEM default:
    #   2 inputs * 2 buffers * D_pad * TILE_P * 4B  <=  ~8 MiB
    vmem_cap_lanes = max(128, (8 * 1024 * 1024) // (16 * D_pad * 4) // 128 * 128)
    TILE_P = min(2048, vmem_cap_lanes, _round_up(P, 128))
    P_pad = _round_up(P, TILE_P)
    M_pad = _round_up(M, 8)

    # --- wrapper glue: gathers + lane-dense (D, P) layout ---
    sources = couples_indices[:, 0]
    dest = couples_indices[:, 1]
    src_t = jnp.zeros((D_pad, P_pad), jnp.float32).at[:D, :P].set(logits[sources].T)
    dst_t = jnp.zeros((D_pad, P_pad), jnp.float32).at[:D, :P].set(logits[dest].T)
    delta = shortest_paths[sources, dest].astype(jnp.float32)
    delta_row = jnp.ones((1, P_pad), jnp.float32).at[0, :P].set(delta)  # pad with 1.0 (safe recip)
    imp = jnp.zeros((M_pad, D_pad), jnp.float32).at[:M, :D].set(logits[important_nodes])

    kernel = functools.partial(_custom_loss2_kernel, p_true=P, m_true=M, tile_p=TILE_P)

    cost = pl.CostEstimate(
        flops=int(4 * P_pad * D_pad + 2 * M_pad * M_pad * D_pad + 8 * M_pad * M_pad),
        transcendentals=int(P_pad + M_pad * M_pad),
        bytes_accessed=int(4 * (2 * D_pad * P_pad + P_pad + M_pad * D_pad + 1)),
    )

    out = pl.pallas_call(
        kernel,
        out_shape=jax.ShapeDtypeStruct((1, 1), jnp.float32),
        grid_spec=pltpu.PrefetchScalarGridSpec(
            num_scalar_prefetch=0,
            grid=(P_pad // TILE_P,),
            in_specs=[
                pl.BlockSpec((D_pad, TILE_P), lambda k: (0, k)),   # src (lane-dense pairs)
                pl.BlockSpec((D_pad, TILE_P), lambda k: (0, k)),   # dst
                pl.BlockSpec((1, TILE_P), lambda k: (0, k)),       # delta row
                pl.BlockSpec((M_pad, D_pad), lambda k: (0, 0)),    # important-node embeddings
            ],
            out_specs=pl.BlockSpec((1, 1), lambda k: (0, 0)),
            scratch_shapes=[
                pltpu.VMEM((1, TILE_P), jnp.float32),              # err accumulator
                pltpu.VMEM((1, TILE_P), jnp.float32),              # weight accumulator
            ],
        ),
        compiler_params=pltpu.CompilerParams(
            dimension_semantics=("arbitrary",),                    # reduction over P-tiles
        ),
        cost_estimate=cost,
    )(src_t, dst_t, delta_row, imp)
    return out[0, 0]


def _reference_loss(logits, shortest_paths, couples_indices, important_nodes):
    s = couples_indices[:, 0]
    d = couples_indices[:, 1]
    diff = logits[s] - logits[d] + STRESS_PDIST_EPS
    dist = jnp.sqrt(jnp.sum(diff * diff, axis=-1))
    delta = shortest_paths[s, d]
    mse = jnp.mean((dist - delta) ** 2)
    stress = jnp.mean(1.0 / (delta + WEIGHT_EPS)) * mse
    m = int(important_nodes.shape[0])
    expl = jnp.float32(0.0)
    for i in range(m):
        for j in range(i + 1, m):
            dd = logits[important_nodes[i]] - logits[important_nodes[j]] + EXPL_PDIST_EPS
            expl = expl + jnp.sqrt(jnp.sum(dd * dd))
    return LAMBDA_STRESS * stress + LAMBDA_EXPLAINER * expl


if __name__ == "__main__":
    key = jax.random.PRNGKey(0)
    k1, k2, k3 = jax.random.split(key, 3)

    N, D, P = 16, 8, 8          # nodes, embedding dim, number of stress pairs
    logits = jax.random.normal(k1, (N, D), dtype=jnp.float32)
    shortest_paths = jax.random.uniform(k2, (N, N), minval=1.0, maxval=5.0, dtype=jnp.float32)
    couples_indices = jax.random.randint(k3, (P, 2), 0, N, dtype=jnp.int32)
    important_nodes = jnp.array([1, 5, 9, 13], dtype=jnp.int32)   # M = 4 -> 6 i<j pairs
    # (g.ndata['feat'] is never used by the loss; only number_of_nodes matters and it cancels.)

    loss = jax.block_until_ready(
        custom_loss2(logits, shortest_paths, couples_indices, important_nodes))
    ref = jax.block_until_ready(
        _reference_loss(logits, shortest_paths, couples_indices, important_nodes))
    assert np.allclose(np.asarray(loss), np.asarray(ref), rtol=1e-4, atol=1e-4), (loss, ref)

    print("KERNEL_OK")
</pallas_src>

<mosaic_0001>
module attributes {stable_mosaic.version = 11 : i64} {
  func.func @_custom_loss2_kernel(%arg0: i32, %arg1: memref<8x128xf32, #tpu.memory_space<vmem>>, %arg2: memref<8x128xf32, #tpu.memory_space<vmem>>, %arg3: memref<1x128xf32, #tpu.memory_space<vmem>>, %arg4: memref<8x8xf32, #tpu.memory_space<vmem>>, %arg5: memref<1x1xf32, #tpu.memory_space<vmem>>, %arg6: memref<1x128xf32, #tpu.memory_space<vmem>>, %arg7: memref<1x128xf32, #tpu.memory_space<vmem>>) attributes {dimension_semantics = [#tpu.dimension_semantics<arbitrary>], iteration_bounds = array<i64: 1>, scalar_prefetch = 0 : i64, scratch_operands = 2 : i64, tpu.core_type = #tpu.core_type<tc>, window_params = [{transform_indices = @transform_0, window_bounds = array<i64: 8, 128>}, {transform_indices = @transform_1, window_bounds = array<i64: 8, 128>}, {transform_indices = @transform_2, window_bounds = array<i64: 1, 128>}, {pipeline_mode = #tpu.pipeline_mode<synchronous>, transform_indices = @transform_3, window_bounds = array<i64: 8, 8>}, {pipeline_mode = #tpu.pipeline_mode<synchronous>, transform_indices = @transform_4, window_bounds = array<i64: 1, 1>}]} {
    %c0_i32 = arith.constant 0 : i32
    %0 = arith.cmpi eq, %arg0, %c0_i32 : i32
    %1 = arith.extui %0 : i1 to i32
    %c0_i32_0 = arith.constant 0 : i32
    %2 = arith.cmpi ne, %1, %c0_i32_0 : i32
    scf.if %2 {
      %cst_18 = arith.constant 0.000000e+00 : f32
      %36 = vector.broadcast %cst_18 : f32 to vector<1x128xf32>
      %c0_19 = arith.constant 0 : index
      %c0_20 = arith.constant 0 : index
      %37 = vector.load %arg6[%c0_19, %c0_20] : memref<1x128xf32, #tpu.memory_space<vmem>>, vector<1x128xf32>
      tpu.vector_store %arg6[%c0_19, %c0_20], %36 {strides = array<i32>} : memref<1x128xf32, #tpu.memory_space<vmem>>, vector<1x128xf32>,
      %cst_21 = arith.constant 0.000000e+00 : f32
      %38 = vector.broadcast %cst_21 : f32 to vector<1x128xf32>
      %c0_22 = arith.constant 0 : index
      %c0_23 = arith.constant 0 : index
      %39 = vector.load %arg7[%c0_22, %c0_23] : memref<1x128xf32, #tpu.memory_space<vmem>>, vector<1x128xf32>
      tpu.vector_store %arg7[%c0_22, %c0_23], %38 {strides = array<i32>} : memref<1x128xf32, #tpu.memory_space<vmem>>, vector<1x128xf32>,
    } else {
    }
    %3 = tpu.iota {dimensions = array<i32: 1>} : vector<1x128xi32>
    %c128_i32 = arith.constant 128 : i32
    %4 = arith.muli %arg0, %c128_i32 : i32
    %5 = vector.broadcast %4 : i32 to vector<1x128xi32>
    %6 = arith.addi %3, %5 : vector<1x128xi32>
    %c8_i32 = arith.constant 8 : i32
    %7 = vector.broadcast %c8_i32 : i32 to vector<1x128xi32>
    %8 = arith.cmpi slt, %6, %7 : vector<1x128xi32>
    %9 = arith.extui %8 : vector<1x128xi1> to vector<1x128xi32>
    %10 = arith.sitofp %9 : vector<1x128xi32> to vector<1x128xf32>
    %c0 = arith.constant 0 : index
    %c0_1 = arith.constant 0 : index
    %11 = vector.load %arg1[%c0, %c0_1] : memref<8x128xf32, #tpu.memory_space<vmem>>, vector<8x128xf32>
    %c0_2 = arith.constant 0 : index
    %c0_3 = arith.constant 0 : index
    %12 = vector.load %arg2[%c0_2, %c0_3] : memref<8x128xf32, #tpu.memory_space<vmem>>, vector<8x128xf32>
    %13 = arith.subf %11, %12 : vector<8x128xf32>
    %cst = arith.constant 9.99999997E-7 : f32
    %14 = vector.broadcast %cst : f32 to vector<8x128xf32>
    %15 = arith.addf %13, %14 : vector<8x128xf32>
    %16 = arith.mulf %15, %15 : vector<8x128xf32>
    %cst_4 = arith.constant dense<0.000000e+00> : vector<128xf32>
    %17 = vector.multi_reduction <add>, %16, %cst_4 [0] : vector<8x128xf32> to vector<128xf32>
    %18 = vector.shape_cast %17 : vector<128xf32> to vector<1x128xf32>
    %19 = math.sqrt %18 : vector<1x128xf32>
    %c0_5 = arith.constant 0 : index
    %c0_6 = arith.constant 0 : index
    %20 = vector.load %arg3[%c0_5, %c0_6] : memref<1x128xf32, #tpu.memory_space<vmem>>, vector<1x128xf32>
    %c0_7 = arith.constant 0 : index
    %c0_8 = arith.constant 0 : index
    %21 = vector.load %arg6[%c0_7, %c0_8] : memref<1x128xf32, #tpu.memory_space<vmem>>, vector<1x128xf32>
    %22 = arith.subf %19, %20 : vector<1x128xf32>
    %23 = arith.mulf %22, %22 : vector<1x128xf32>
    %24 = arith.mulf %10, %23 : vector<1x128xf32>
    %25 = arith.addf %21, %24 : vector<1x128xf32>
    %c0_9 = arith.constant 0 : index
    %c0_10 = arith.constant 0 : index
    %26 = vector.load %arg6[%c0_9, %c0_10] : memref<1x128xf32, #tpu.memory_space<vmem>>, vector<1x128xf32>
    tpu.vector_store %arg6[%c0_9, %c0_10], %25 {strides = array<i32>} : memref<1x128xf32, #tpu.memory_space<vmem>>, vector<1x128xf32>,
    %c0_11 = arith.constant 0 : index
    %c0_12 = arith.constant 0 : index
    %27 = vector.load %arg7[%c0_11, %c0_12] : memref<1x128xf32, #tpu.memory_space<vmem>>, vector<1x128xf32>
    %cst_13 = arith.constant 1.000000e-07 : f32
    %28 = vector.broadcast %cst_13 : f32 to vector<1x128xf32>
    %29 = arith.addf %20, %28 : vector<1x128xf32>
    %30 = arith.divf %10, %29 : vector<1x128xf32>
    %31 = arith.addf %27, %30 : vector<1x128xf32>
    %c0_14 = arith.constant 0 : index
    %c0_15 = arith.constant 0 : index
    %32 = vector.load %arg7[%c0_14, %c0_15] : memref<1x128xf32, #tpu.memory_space<vmem>>, vector<1x128xf32>
    tpu.vector_store %arg7[%c0_14, %c0_15], %31 {strides = array<i32>} : memref<1x128xf32, #tpu.memory_space<vmem>>, vector<1x128xf32>,
    %c0_i32_16 = arith.constant 0 : i32
    %33 = arith.cmpi eq, %arg0, %c0_i32_16 : i32
    %34 = arith.extui %33 : i1 to i32
    %c0_i32_17 = arith.constant 0 : i32
    %35 = arith.cmpi ne, %34, %c0_i32_17 : i32
    scf.if %35 {
      %c0_18 = arith.constant 0 : index
      %c0_19 = arith.constant 0 : index
      %36 = vector.load %arg6[%c0_18, %c0_19] : memref<1x128xf32, #tpu.memory_space<vmem>>, vector<1x128xf32>
      %cst_20 = arith.constant dense<0.000000e+00> : vector<1xf32>
      %37 = vector.multi_reduction <add>, %36, %cst_20 [1] : vector<1x128xf32> to vector<1xf32>
      %38 = vector.shape_cast %37 : vector<1xf32> to vector<1x1xf32>
      %c0_21 = arith.constant 0 : index
      %c0_22 = arith.constant 0 : index
      %39 = vector.load %arg7[%c0_21, %c0_22] : memref<1x128xf32, #tpu.memory_space<vmem>>, vector<1x128xf32>
      %cst_23 = arith.constant dense<0.000000e+00> : vector<1xf32>
      %40 = vector.multi_reduction <add>, %39, %cst_23 [1] : vector<1x128xf32> to vector<1xf32>
      %41 = vector.shape_cast %40 : vector<1xf32> to vector<1x1xf32>
      %cst_24 = arith.constant 1.250000e-01 : f32
      %42 = vector.broadcast %cst_24 : f32 to vector<1x1xf32>
      %43 = arith.mulf %41, %42 : vector<1x1xf32>
      %cst_25 = arith.constant 1.250000e-01 : f32
      %44 = vector.broadcast %cst_25 : f32 to vector<1x1xf32>
      %45 = arith.mulf %38, %44 : vector<1x1xf32>
      %46 = arith.mulf %43, %45 : vector<1x1xf32>
      %c0_26 = arith.constant 0 : index
      %c0_27 = arith.constant 0 : index
      %47 = vector.load %arg4[%c0_26, %c0_27] : memref<8x8xf32, #tpu.memory_space<vmem>>, vector<8x8xf32>
      %cst_28 = arith.constant dense<0.000000e+00> : vector<8x8xf32>
      %48 = tpu.matmul %47, %47, %cst_28 {dimension_numbers = #tpu.dot_dimension_numbers<[1], [1], [0], [0], [0, 0, 1, 0], [], []>} : vector<8x8xf32>, vector<8x8xf32>, vector<8x8xf32> -> vector<8x8xf32>
      %49 = tpu.iota {dimensions = array<i32: 0>} : vector<8x8xi32>
      %50 = tpu.iota {dimensions = array<i32: 1>} : vector<8x8xi32>
      %51 = arith.cmpi eq, %49, %50 : vector<8x8xi32>
      %cst_29 = arith.constant 0.000000e+00 : f32
      %52 = vector.broadcast %cst_29 : f32 to vector<8x8xf32>
      %53 = arith.select %51, %48, %52 : vector<8x8xi1>, vector<8x8xf32>
      %cst_30 = arith.constant dense<0.000000e+00> : vector<8xf32>
      %54 = vector.multi_reduction <add>, %53, %cst_30 [1] : vector<8x8xf32> to vector<8xf32>
      %55 = vector.shape_cast %54 : vector<8xf32> to vector<8x1xf32>
      %cst_31 = arith.constant dense<0.000000e+00> : vector<8xf32>
      %56 = vector.multi_reduction <add>, %53, %cst_31 [0] : vector<8x8xf32> to vector<8xf32>
      %57 = vector.shape_cast %56 : vector<8xf32> to vector<1x8xf32>
      %58 = vector.broadcast %55 : vector<8x1xf32> to vector<8x8xf32>
      %59 = vector.broadcast %57 : vector<1x8xf32> to vector<8x8xf32>
      %60 = arith.addf %58, %59 : vector<8x8xf32>
      %cst_32 = arith.constant 2.000000e+00 : f32
      %61 = vector.broadcast %cst_32 : f32 to vector<8x8xf32>
      %62 = arith.mulf %61, %48 : vector<8x8xf32>
      %63 = arith.subf %60, %62 : vector<8x8xf32>
      %cst_33 = arith.constant 0.000000e+00 : f32
      %64 = vector.broadcast %cst_33 : f32 to vector<8x8xf32>
      %65 = arith.maximumf %63, %64 : vector<8x8xf32>
      %66 = math.sqrt %65 : vector<8x8xf32>
      %67 = arith.cmpi sgt, %50, %49 : vector<8x8xi32>
      %c4_i32 = arith.constant 4 : i32
      %68 = vector.broadcast %c4_i32 : i32 to vector<8x8xi32>
      %69 = arith.cmpi slt, %50, %68 : vector<8x8xi32>
      %70 = arith.andi %67, %69 : vector<8x8xi1>
      %c4_i32_34 = arith.constant 4 : i32
      %71 = vector.broadcast %c4_i32_34 : i32 to vector<8x8xi32>
      %72 = arith.cmpi slt, %49, %71 : vector<8x8xi32>
      %73 = arith.andi %70, %72 : vector<8x8xi1>
      %cst_35 = arith.constant 0.000000e+00 : f32
      %74 = vector.broadcast %cst_35 : f32 to vector<8x8xf32>
      %75 = arith.select %73, %66, %74 : vector<8x8xi1>, vector<8x8xf32>
      %cst_36 = arith.constant dense<0.000000e+00> : vector<8xf32>
      %76 = vector.multi_reduction <add>, %75, %cst_36 [0] : vector<8x8xf32> to vector<8xf32>
      %77 = vector.shape_cast %76 : vector<8xf32> to vector<1x8xf32>
      %cst_37 = arith.constant dense<0.000000e+00> : vector<1xf32>
      %78 = vector.multi_reduction <add>, %77, %cst_37 [1] : vector<1x8xf32> to vector<1xf32>
      %79 = vector.shape_cast %78 : vector<1xf32> to vector<1x1xf32>
      %cst_38 = arith.constant 1.000000e+00 : f32
      %80 = vector.broadcast %cst_38 : f32 to vector<1x1xf32>
      %81 = arith.mulf %80, %46 : vector<1x1xf32>
      %cst_39 = arith.constant 1.000000e+00 : f32
      %82 = vector.broadcast %cst_39 : f32 to vector<1x1xf32>
      %83 = arith.mulf %82, %79 : vector<1x1xf32>
      %84 = arith.addf %81, %83 : vector<1x1xf32>
      %c0_40 = arith.constant 0 : index
      %c0_41 = arith.constant 0 : index
      %85 = vector.load %arg5[%c0_40, %c0_41] : memref<1x1xf32, #tpu.memory_space<vmem>>, vector<1x1xf32>
      tpu.vector_store %arg5[%c0_40, %c0_41], %84 {strides = array<i32>} : memref<1x1xf32, #tpu.memory_space<vmem>>, vector<1x1xf32>,
    } else {
    }
    return
  }
  func.func @transform_0(%arg0: i32) -> (i32, i32) {
    %c0_i32 = arith.constant 0 : i32
    %c0_i32_0 = arith.constant 0 : i32
    return %c0_i32, %arg0 : i32, i32
  }
  func.func @transform_1(%arg0: i32) -> (i32, i32) {
    %c0_i32 = arith.constant 0 : i32
    %c0_i32_0 = arith.constant 0 : i32
    return %c0_i32, %arg0 : i32, i32
  }
  func.func @transform_2(%arg0: i32) -> (i32, i32) {
    %c0_i32 = arith.constant 0 : i32
    %c0_i32_0 = arith.constant 0 : i32
    return %c0_i32, %arg0 : i32, i32
  }
  func.func @transform_3(%arg0: i32) -> (i32, i32) {
    %c0_i32 = arith.constant 0 : i32
    %c0_i32_0 = arith.constant 0 : i32
    %c0_i32_1 = arith.constant 0 : i32
    return %c0_i32, %c0_i32_0 : i32, i32
  }
  func.func @transform_4(%arg0: i32) -> (i32, i32) {
    %c0_i32 = arith.constant 0 : i32
    %c0_i32_0 = arith.constant 0 : i32
    %c0_i32_1 = arith.constant 0 : i32
    return %c0_i32, %c0_i32_0 : i32, i32
  }
}

</mosaic_0001>

<llo_original>
// kernel: tpu_custom_call.1
$region0: #{tpu_custom_call.1}
  #allocation0 [shape = 'u32[]', space=smem, size = 0x4, offset = 0x4, fixed_abs, tag = 'smem constant byte address 0x4 - core index']
  #allocation1 [shape = 'u32[72,128]{1,0:T(1,128)}', space=vmem, size = 0x9000, scoped, tag = 'internal scratch']
  #allocation2 [shape = 'f32[1,128]{1,0:T(1,128)}', space=vmem, size = 0x200, scoped, tag = 'scratch operand']
  #allocation3 [shape = 'f32[1,128]{1,0:T(1,128)}', space=vmem, size = 0x200, scoped, tag = 'scratch operand']
  %s0 = inlined_call_operand.hbm [shape: f32[8,128], index: 0, kind: input, shape index: {}]
  %s1 = inlined_call_operand.hbm [shape: f32[8,128], index: 1, kind: input, shape index: {}]
  %s2 = inlined_call_operand.vmem [shape: f32[1,128], index: 2, kind: input, shape index: {}]
  %s3 = inlined_call_operand.hbm [shape: f32[8,8], index: 3, kind: input, shape index: {}]
  %s4 = inlined_call_operand.hbm [shape: f32[1,1], index: 4, kind: output, shape index: {}]
  %s5 = sld [smem:[#allocation0]]
  $region46: #{tpu_custom_call.1} parent=0
    _
  %s7 = ssub.s32 1, %s5
  %s8 = scalar_select 0, %s7, %s5
  $region1: #{tpu_custom_call.1} parent=0
    #allocation4 [shape = 'u8[4096]{0}', space=vmem, size = 0x1000, scoped, tag = 'input window, operand 0, single buffered']
    #allocation5 [shape = 's32[1]{0}', space=sflag, size = 0x4, scoped, tag = 'scoped memory for tpu_custom_call.1']
    #allocation6 [shape = 's32[1]{0}', space=sflag, size = 0x4, scoped, tag = 'scoped memory for tpu_custom_call.1']
    #allocation7 [shape = 'u8[4096]{0}', space=vmem, size = 0x1000, scoped, tag = 'input window, operand 1, single buffered']
    #allocation8 [shape = 's32[1]{0}', space=sflag, size = 0x4, scoped, tag = 'scoped memory for tpu_custom_call.1']
    #allocation9 [shape = 'u8[4096]{0}', space=vmem, size = 0x1000, scoped, tag = 'input window, operand 3, single buffered']
    #allocation10 [shape = 'u8[512]{0}', space=vmem, size = 0x400, scoped, tag = 'output window, operand 0, single buffered']
    %9 = vsyncpa [#allocation5], 0
    %10 = vsyncpa [#allocation8], 0
    %11 = vsyncpa [#allocation6], 0
    // Predicated region
    $region2: #{tpu_custom_call.1} parent=1 // pred_check
      _
    $region3: #{tpu_custom_call.1} parent=1 // pred_check_branch
      %13 = sbr.rel (0) target = $region5
    $region4: #{tpu_custom_call.1} parent=1 // pred_region
      %15 = vsyncadd [#allocation5], 0
      %s17 = sshll.u32 %s0, 4
      %s18 = int_to_ptr.hbm [resolvable:$true] %s17
      %s19 = sshll.u32 [#allocation4], 4
      %s20 = int_to_ptr.vmem [resolvable:$true] %s19
      %22 = dma.hbm_to_vmem [thread:$0]  %s18, 128, %s20, [#allocation5]
    $region5: #{tpu_custom_call.1} parent=1 // pred_fallthru
      _
    // Predicated region
    $region6: #{tpu_custom_call.1} parent=1 // pred_check
      _
    $region7: #{tpu_custom_call.1} parent=1 // pred_check_branch
      %24 = sbr.rel (0) target = $region9
    $region8: #{tpu_custom_call.1} parent=1 // pred_region
      %26 = vsyncadd [#allocation8], 0
      %s28 = sshll.u32 %s1, 4
      %s29 = int_to_ptr.hbm [resolvable:$true] %s28
      %s30 = sshll.u32 [#allocation7], 4
      %s31 = int_to_ptr.vmem [resolvable:$true] %s30
      %33 = dma.hbm_to_vmem [thread:$0]  %s29, 128, %s31, [#allocation8]
    $region9: #{tpu_custom_call.1} parent=1 // pred_fallthru
      _
    // Predicated region
    $region10: #{tpu_custom_call.1} parent=1 // pred_check
      _
    $region11: #{tpu_custom_call.1} parent=1 // pred_check_branch
      %35 = sbr.rel (0) target = $region13
    $region12: #{tpu_custom_call.1} parent=1 // pred_region
      _
    $region13: #{tpu_custom_call.1} parent=1 // pred_fallthru
      _
    // Predicated region
    $region14: #{tpu_custom_call.1} parent=1 // pred_check
      _
    $region15: #{tpu_custom_call.1} parent=1 // pred_check_branch
      %37 = sbr.rel (0) target = $region17
    $region16: #{tpu_custom_call.1} parent=1 // pred_region
      %39 = vsyncadd [#allocation8], 0
      %s41 = sshll.u32 %s3, 4
      %s42 = int_to_ptr.hbm [resolvable:$true] %s41
      %s43 = sshll.u32 [#allocation9], 4
      %s44 = int_to_ptr.vmem [resolvable:$true] %s43
      %46 = dma.hbm_to_vmem [thread:$0]  %s42, 128, %s44, [#allocation8]
    $region17: #{tpu_custom_call.1} parent=1 // pred_fallthru
      _
    // Predicated region
    $region18: #{tpu_custom_call.1} parent=1 // pred_check
      _
    $region19: #{tpu_custom_call.1} parent=1 // pred_check_branch
      %48 = sbr.rel (0) target = $region21
    $region20: #{tpu_custom_call.1} parent=1 // pred_region
      %50 = dma.done [#allocation5], 128
    $region21: #{tpu_custom_call.1} parent=1 // pred_fallthru
      _
    // Predicated region
    $region22: #{tpu_custom_call.1} parent=1 // pred_check
      _
    $region23: #{tpu_custom_call.1} parent=1 // pred_check_branch
      %52 = sbr.rel (0) target = $region25
    $region24: #{tpu_custom_call.1} parent=1 // pred_region
      %54 = dma.done [#allocation8], 128
    $region25: #{tpu_custom_call.1} parent=1 // pred_fallthru
      _
    // Predicated region
    $region26: #{tpu_custom_call.1} parent=1 // pred_check
      _
    $region27: #{tpu_custom_call.1} parent=1 // pred_check_branch
      %56 = sbr.rel (0) target = $region29
    $region28: #{tpu_custom_call.1} parent=1 // pred_region
      %58 = dma.done [#allocation8], 128
    $region29: #{tpu_custom_call.1} parent=1 // pred_fallthru
      _
    %p59 = scmp.eq.s32.totalorder 0, 0
    // Predicated region
    $region30: #{tpu_custom_call.1} parent=1 // pred_check
      %p60 = pneg %p59
    $region31: #{tpu_custom_call.1} parent=1 // pred_check_branch
      %62 = sbr.rel (%p60) target = $region33
    $region32: #{tpu_custom_call.1} parent=1 // pred_region
      %63 = vst [vmem:[#allocation2] sm:$0x1] 0.0
      %64 = vst [vmem:[#allocation3] sm:$0x1] 0.0
    $region33: #{tpu_custom_call.1} parent=1 // pred_fallthru
      _
    %v65 = vlaneseq
    %v66 = vand.u32 %v65, 127
    %s67 = smul.u32 0, 128
    %v68 = vstv %s67
    %v69 = vadd.s32 %v66, %v68
    %vm70 = vcmp.lt.s32.totalorder %v69, 8
    %v71 = vsel %vm70, 1, 0
    %v72 = vcvt.s32.f32 %v71
    %v73 = vld [vmem:[#allocation4] sm:$0xff]
    %v74 = vld [vmem:[#allocation7] sm:$0xff]
    %v75 = vsub.f32 %v73, %v74
    %v76 = vadd.f32 %v75, 1e-06
    %v77 = vmul.f32 %v76, %v76
    %v78 = vrot.slane %v77, 4
    %v79 = vadd.f32 %v77, %v78
    %v80 = vrot.slane %v79, 2
    %v81 = vadd.f32 %v79, %v80
    %v82 = vrot.slane %v81, 1
    %v83 = vadd.f32 %v81, %v82
    %v84 = vrsqrt.pop %v83
    %v85 = vmul.f32 %v84, %v83
    %v86 = vmul.f32 %v85, %v84
    %v87 = vmul.f32 0.5, %v86
    %v88 = vsub.f32 1.5, %v87
    %v89 = vmul.f32 %v84, %v88
    %v90 = vmul.f32 %v83, %v89
    %vm91 = vcmp.eq.f32.partialorder %v83, inf
    %v92 = vsel %vm91, %v83, %v90
    %vm93 = vcmp.eq.f32.partialorder %v83, 0.0
    %v94 = vand.u32 %v83, 2147483648
    %v95 = vsel %vm93, %v94, %v92
    %v96 = vld [vmem:[%s2] sm:$0x1]
    %v97 = vld [vmem:[#allocation2] sm:$0x1]
    %v98 = vsub.f32 %v95, %v96
    %v99 = vmul.f32 %v98, %v98
    %v100 = vmul.f32 %v72, %v99
    %v101 = vadd.f32 %v97, %v100
    %102 = vst [vmem:[#allocation2] sm:$0x1] %v101
    %v103 = vld [vmem:[#allocation3] sm:$0x1]
    %v104 = vadd.f32 %v96, 1e-07
    %v105 = vrcp.pop %v104
    %v106 = vmul.f32 %v104, %v105
    %v107 = vsub.f32 1.0, %v106
    %v108 = vmul.f32 %v105, %v107
    %v109 = vadd.f32 %v105, %v108
    %vm110 = vweird.f32 %v104
    %vm111 = vweird.f32 %v105
    %vm112 = vmor %vm110, %vm111
    %v113 = vsel %vm112, %v105, %v109
    %v114 = vand.u32 2147483647, %v104
    %vm115 = vcmp.eq.f32.partialorder %v114, 8.507059e+37
    %v116 = vand.u32 %v104, 2147483648
    %v117 = vor.u32 1.1754944e-38, %v116
    %v118 = vsel %vm115, %v117, %v113
    %v119 = vmul.f32 %v72, %v118
    %v120 = vadd.f32 %v103, %v119
    %121 = vst [vmem:[#allocation3] sm:$0x1] %v120
    // Predicated region
    $region34: #{tpu_custom_call.1} parent=1 // pred_check
      %p122 = pneg %p59
    $region35: #{tpu_custom_call.1} parent=1 // pred_check_branch
      %124 = sbr.rel (%p122) target = $region37
    $region36: #{tpu_custom_call.1} parent=1 // pred_region
      %v125 = vld [vmem:[#allocation2] sm:$0x1]
      %vm126 = vcmask 1040384
      %v127 = vsel %vm126, %v125, 0.0
      %128 = vadd.xlane.f32.xlu0 %v127
      %v129 = vpop.xlane.xlu0 %128
      %v130 = vld [vmem:[#allocation3] sm:$0x1]
      %v131 = vsel %vm126, %v130, 0.0
      %132 = vadd.xlane.f32.xlu0 %v131
      %v133 = vpop.xlane.xlu0 %132
      %v134 = vmul.f32 %v133, 0.125
      %v135 = vmul.f32 %v129, 0.125
      %v136 = vmul.f32 %v134, %v135
      %v137 = vld [vmem:[#allocation9] sm:$0xff]
      %vm138 = vcmask 64512
      %v140 = vsel %vm138, %v137, 0
      %142 = vmatpush.xpose.msra.mxu0 0.0
      %143 = vmatpush.xpose.msra.mxu0 0.0
      %144 = vmatpush.xpose.msra.mxu0 0.0
      %145 = vmatpush.xpose.msra.mxu0 0.0
      %146 = vmatpush.xpose.msra.mxu0 0.0
      %147 = vmatpush.xpose.msra.mxu0 0.0
      %148 = vmatpush.xpose.msra.mxu0 0.0
      %149 = vmatpush.xpose.msra.mxu0 0.0
      %150 = vmatpush.xpose.msra.mxu0 0.0
      %151 = vmatpush.xpose.msra.mxu0 0.0
      %152 = vmatpush.xpose.msra.mxu0 0.0
      %153 = vmatpush.xpose.msra.mxu0 0.0
      %154 = vmatpush.xpose.msra.mxu0 0.0
      %155 = vmatpush.xpose.msra.mxu0 0.0
      %156 = vmatpush.xpose.msra.mxu0 0.0
      %157 = vmatpush.xpose.msra.mxu0 %v140
      %158 = vmatmul.f32.gmra.mxu0 %v140
      %v159 = vpop.f32.mrf.mxu0
      %v160 = vadd.f32 0.0, %v159
      %161 = vdwg.mxu0
      %v162 = vlaneseq
      %v163 = vshrl.u32 %v162, 7
      %vm164 = vcmp.eq.s32.totalorder %v163, %v66
      %v165 = vsel %vm164, %v160, 0.0
      %v166 = vsel %vm138, %v165, 0.0
      %167 = vadd.xlane.f32.xlu0 %v166
      %v168 = vpop.xlane.xlu0 %167
      %v169 = vrot.slane %v166, 4
      %v170 = vadd.f32 %v166, %v169
      %v171 = vrot.slane %v170, 2
      %v172 = vadd.f32 %v170, %v171
      %v173 = vrot.slane %v172, 1
      %v174 = vadd.f32 %v172, %v173
      %v175 = vadd.f32 %v168, %v174
      %v176 = vmul.f32 %v160, 2.0
      %v177 = vsub.f32 %v175, %v176
      %v178 = vmax.f32 %v177, 0.0
      %v179 = vrsqrt.pop %v178
      %v180 = vmul.f32 %v179, %v178
      %v181 = vmul.f32 %v180, %v179
      %v182 = vmul.f32 0.5, %v181
      %v183 = vsub.f32 1.5, %v182
      %v184 = vmul.f32 %v179, %v183
      %v185 = vmul.f32 %v178, %v184
      %vm186 = vcmp.eq.f32.partialorder %v178, inf
      %v187 = vsel %vm186, %v178, %v185
      %vm188 = vcmp.eq.f32.partialorder %v178, 0.0
      %v189 = vand.u32 %v178, 2147483648
      %v190 = vsel %vm188, %v189, %v187
      %vm191 = vcmp.gt.s32.totalorder %v66, %v163
      %vm192 = vcmp.lt.s32.totalorder %v66, 4
      %vm193 = vmand %vm191, %vm192
      %vm194 = vcmp.lt.s32.totalorder %v163, 4
      %vm195 = vmand %vm193, %vm194
      %v196 = vsel %vm195, %v190, 0.0
      %v197 = vsel %vm138, %v196, 0.0
      %v198 = vrot.slane %v197, 4
      %v199 = vadd.f32 %v197, %v198
      %v200 = vrot.slane %v199, 2
      %v201 = vadd.f32 %v199, %v200
      %v202 = vrot.slane %v201, 1
      %v203 = vadd.f32 %v201, %v202
      %v204 = vsel %vm138, %v203, 0.0
      %205 = vadd.xlane.f32.xlu0 %v204
      %v206 = vpop.xlane.xlu0 %205
      %v207 = vadd.f32 %v136, %v206
      %vm208 = vcmask 0
      %209 = vst.msk [vmem:[#allocation10] sm:$0x1] %vm208, %v207
    $region37: #{tpu_custom_call.1} parent=1 // pred_fallthru
      _
    // Predicated region
    $region38: #{tpu_custom_call.1} parent=1 // pred_check
      _
    $region39: #{tpu_custom_call.1} parent=1 // pred_check_branch
      %211 = sbr.rel (0) target = $region41
    $region40: #{tpu_custom_call.1} parent=1 // pred_region
      %213 = vsyncadd [#allocation6], 0
      %s215 = sshll.u32 [#allocation10], 4
      %s216 = int_to_ptr.vmem [resolvable:$true] %s215
      %s217 = sshll.u32 %s4, 4
      %s218 = int_to_ptr.hbm [resolvable:$true] %s217
      %220 = dma.vmem_to_hbm [thread:$0]  %s216, 16, %s218, [#allocation6]
    $region41: #{tpu_custom_call.1} parent=1 // pred_fallthru
      _
    // Predicated region
    $region42: #{tpu_custom_call.1} parent=1 // pred_check
      _
    $region43: #{tpu_custom_call.1} parent=1 // pred_check_branch
      %222 = sbr.rel (0) target = $region45
    $region44: #{tpu_custom_call.1} parent=1 // pred_region
      %224 = dma.done [#allocation6], 16
    $region45: #{tpu_custom_call.1} parent=1 // pred_fallthru
      _
    %225 = vsyncpa [#allocation5], 1
    %226 = vsyncpa [#allocation8], 1
    %227 = vsyncpa [#allocation6], 1

</llo_original>
